<compile_context>
chip_gen: v6e
topology: v6e:2x2x1
jax: 0.10.0
libtpu: 0.0.40
codegen_flags: <defaults>
</compile_context>

<pallas_src>
import math
import functools

import jax
import jax.numpy as jnp
from jax import lax
from jax.experimental import pallas as pl
from jax.experimental.pallas import tpu as pltpu


# --------------------------------------------------------------------------- #
# Kernel
# --------------------------------------------------------------------------- #
def _arcface_kernel(lab_ref, emb_ref, w_ref, out_ref, *,
                    s, cos_m, sin_m, th, mm, easy_margin, chunk_d):
    j = pl.program_id(0)                       # class-tile index (outer axis)
    tb, tc = out_ref.shape
    D = w_ref.shape[1]

    emb = emb_ref[...]                         # (tb, D)
    w = w_ref[...]                             # (tc, D)

    # cos_raw[b, c] = <emb_b, w_c> — contract over D directly (no wn.T / XLU
    # transpose); MXU accumulates in f32.
    cos_raw = lax.dot_general(
        emb, w, dimension_numbers=(((1,), (1,)), ((), ())),
        preferred_element_type=jnp.float32)    # (tb, tc) f32

    # Per-class inverse L2 norm of the weight tile, produced directly as a
    # (1, tc) lane-major row via a ones-row MXU matvec (no vector relayout).
    # The square runs in the weight's native dtype (bf16 path: no f32 cast,
    # half the temporary); for large D it is chunked so the (tc, chunk_d)
    # temporary stays bounded (important on v5e).
    contract = (((1,), (1,)), ((), ()))
    ones_row = jnp.ones((1, chunk_d), w.dtype)
    if chunk_d == D:
        nrm_sq = lax.dot_general(ones_row, w * w, dimension_numbers=contract,
                                 preferred_element_type=jnp.float32)
    else:
        nchunks = D // chunk_d

        def body(i, acc):
            c0 = pl.multiple_of(i * chunk_d, chunk_d)
            wc = w_ref[:, pl.ds(c0, chunk_d)]
            return acc + lax.dot_general(ones_row, wc * wc,
                                         dimension_numbers=contract,
                                         preferred_element_type=jnp.float32)

        nrm_sq = lax.fori_loop(0, nchunks, body,
                               jnp.zeros((1, tc), jnp.float32))
    inv_norm = lax.rsqrt(jnp.maximum(nrm_sq, 1e-24))   # == 1/max(||w_c||, 1e-12)

    # F.linear(emb, F.normalize(w)) == (emb @ w.T) * (1/||w_c||), then clamp.
    cos_th = jnp.clip(cos_raw * inv_norm, -1.0, 1.0)

    sin_th = jnp.sqrt(jnp.maximum(1.0 - cos_th * cos_th, 0.0))
    cos_th_m = cos_th * cos_m - sin_th * sin_m
    if easy_margin:
        cos_th_m = jnp.where(cos_th > 0.0, cos_th_m, cos_th)
        # The PyTorch module applies this override unconditionally afterwards,
        # so it must stay for easy_margin=True.
        cos_th_m = jnp.where(cos_th - th <= 0.0, cos_th - mm, cos_th_m)
    else:
        # For easy_margin=False the module's trailing override has the exact
        # same condition/value, so a single select is equivalent.
        cos_th_m = jnp.where(cos_th > th, cos_th_m, cos_th - mm)

    # One-hot blend + scale fused into a single select (no float one-hot).
    lbl = lab_ref[...]                                        # (tb, 1) int32
    class_ids = lax.broadcasted_iota(jnp.int32, (tb, tc), 1) + j * tc
    out_ref[...] = (jnp.where(class_ids == lbl, cos_th_m, cos_th) * s
                    ).astype(out_ref.dtype)


# --------------------------------------------------------------------------- #
# Tiling / VMEM heuristics
# --------------------------------------------------------------------------- #
def _round_up(x, a):
    return ((x + a - 1) // a) * a


def _default_vmem_budget():
    """Generation-aware per-kernel VMEM budget: ~3/4 of physical capacity.
    v7x (64 MiB/TC) -> ~48 MiB; v5e/v6e (128 MiB) -> ~96 MiB."""
    cap = None
    try:
        cap = int(pltpu.get_tpu_info().vmem_capacity_bytes)
    except Exception:
        cap = None
    if not cap or cap <= 0:
        cap = 64 << 20   # conservative fallback (smallest per-core VMEM)
    return int(min(cap - (16 << 20), (cap * 3) // 4))


def _pick_chunk_d(D):
    for c in (512, 256):
        if D > c and D % c == 0:
            return c
    return D


def _pick_tile_b(B):
    if B <= 512:
        return B
    for t in (512, 384, 256, 128, 64, 32, 16, 8):
        if B % t == 0:
            return t
    return B   # indivisible batch: keep the full block resident


def _vmem_need(tile_b, tile_c, D, w_bytes, e_bytes, chunk_d):
    """Working-set estimate INCLUDING in-kernel temporaries (perf review)."""
    return (2 * tile_c * D * w_bytes        # double-buffered weight tile
            + 2 * tile_b * D * e_bytes      # double-buffered embeddings tile
            + 2 * tile_b * tile_c * 4       # double-buffered f32 output tile
            + 2 * tile_b * 128 * 4          # labels block (lane-padded)
            + 5 * tile_b * tile_c * 4       # f32 cos/sin/margin/iota/select temps
            + tile_c * chunk_d * w_bytes    # chunked weight-square temporary
            + tile_c * 4 * 4                # (1, tile_c) norm rows
            + (2 << 20))                    # compiler scratch / misc headroom


def _pick_tile_c(C, D, tile_b, w_bytes, e_bytes, chunk_d, budget):
    cap = 4096                               # giant tiles buy nothing past the
    hi = min(cap, _round_up(C, 256))         # HBM roofline, cost VMEM/pipelining
    fits = lambda tc: _vmem_need(tile_b, tc, D, w_bytes, e_bytes, chunk_d) <= budget

    cands = [tc for tc in range(256, hi + 1, 256) if fits(tc)]    # 2x256^2 MXU
    if not cands:
        cands = [tc for tc in range(128, hi + 1, 128) if fits(tc)]
    if not cands:
        cands = [128]

    steps = lambda tc: pl.cdiv(C, tc)
    multi4 = [tc for tc in cands if steps(tc) >= 4 and tc >= 512]
    if multi4:                   # >=4 steps -> >=2 pipelined steps per v7x TC
        return max(multi4)
    multi2 = [tc for tc in cands if steps(tc) >= 2]
    if multi2:                   # at least let megacore split the class axis
        return max(multi2)
    return max(cands)


# --------------------------------------------------------------------------- #
# Wrapper
# --------------------------------------------------------------------------- #
def arcface_forward(embeddings, labels, weight, *, s=64.0, m=0.5,
                    easy_margin=False, tile_c=None, tile_b=None,
                    use_bf16=True, vmem_budget_bytes=None,
                    weight_buffers=2):
    """embeddings (B, D), labels (B,), weight (C, D) -> (B, C) f32 logits."""
    B, D = embeddings.shape
    C, D2 = weight.shape
    assert D == D2

    if use_bf16:
        # Halves the HBM weight stream (the kernel is HBM-bound on it); all
        # margin elementwise math stays f32 inside the kernel.
        embeddings = embeddings.astype(jnp.bfloat16)
        weight = weight.astype(jnp.bfloat16)

    w_bytes = weight.dtype.itemsize
    e_bytes = embeddings.dtype.itemsize
    budget = (int(vmem_budget_bytes) if vmem_budget_bytes is not None
              else _default_vmem_budget())

    chunk_d = _pick_chunk_d(D)
    if tile_b is None:
        tile_b = _pick_tile_b(B)
    if tile_c is None:
        tile_c = _pick_tile_c(C, D, tile_b, w_bytes, e_bytes, chunk_d, budget)

    # Ragged class counts: zero-pad C up to a tile multiple; padded columns
    # produce exactly 0 (zero rows dot anything is 0) and are sliced off.
    n_ct = pl.cdiv(C, tile_c)
    C_pad = n_ct * tile_c
    if C_pad != C:
        weight = jnp.pad(weight, ((0, C_pad - C), (0, 0)))
    n_bt = B // tile_b if B % tile_b == 0 else 1
    if n_bt == 1:
        tile_b = B

    labels_2d = labels.reshape(B, 1).astype(jnp.int32)

    kernel = functools.partial(
        _arcface_kernel,
        s=float(s),
        cos_m=float(math.cos(m)),
        sin_m=float(math.sin(m)),
        th=float(math.cos(math.pi - m)),
        mm=float(math.sin(math.pi - m) * m),
        easy_margin=bool(easy_margin),
        chunk_d=chunk_d,
    )

    need = _vmem_need(tile_b, tile_c, D, w_bytes, e_bytes, chunk_d)
    vmem_limit = int(max(32 << 20, need + (8 << 20)))

    w_spec_kwargs = {}
    if weight_buffers is not None and int(weight_buffers) > 2:
        # Optional deeper buffering of the weight stream (use if measured wall
        # exceeds weight-bytes/HBM-BW); default 2 keeps the safe auto path.
        w_spec_kwargs = dict(pipeline_mode=pl.Buffered(int(weight_buffers)))

    out = pl.pallas_call(
        kernel,
        out_shape=jax.ShapeDtypeStruct((B, C_pad), jnp.float32),
        grid_spec=pltpu.PrefetchScalarGridSpec(
            num_scalar_prefetch=0,
            grid=(n_ct, n_bt),   # class tiles outer (weight DMA'd once/stripe)
            in_specs=[
                pl.BlockSpec((tile_b, 1), lambda j, i: (i, 0)),     # labels
                pl.BlockSpec((tile_b, D), lambda j, i: (i, 0)),     # embeddings
                pl.BlockSpec((tile_c, D), lambda j, i: (j, 0),      # weight stripe
                             **w_spec_kwargs),
            ],
            out_specs=pl.BlockSpec((tile_b, tile_c), lambda j, i: (i, j)),
        ),
        compiler_params=pltpu.CompilerParams(
            dimension_semantics=("parallel", "parallel"),
            vmem_limit_bytes=vmem_limit,
        ),
    )(labels_2d, embeddings, weight)

    if C_pad != C:
        out = out[:, :C]
    return out


# --------------------------------------------------------------------------- #
# Pure-JAX reference (port of the PyTorch module) and self-test
# --------------------------------------------------------------------------- #
def _reference(embeddings, labels, weight, *, s, m, easy_margin):
    nrm = jnp.sqrt(jnp.sum(weight * weight, axis=1, keepdims=True))
    wn = weight / jnp.maximum(nrm, 1e-12)
    cos_th = jnp.clip(
        jnp.dot(embeddings, wn.T, precision=lax.Precision.HIGHEST), -1.0, 1.0)
    sin_th = jnp.sqrt(jnp.maximum(1.0 - cos_th * cos_th, 0.0))
    cos_m, sin_m = math.cos(m), math.sin(m)
    th, mm = math.cos(math.pi - m), math.sin(math.pi - m) * m
    cos_th_m = cos_th * cos_m - sin_th * sin_m
    if easy_margin:
        cos_th_m = jnp.where(cos_th > 0.0, cos_th_m, cos_th)
    else:
        cos_th_m = jnp.where(cos_th > th, cos_th_m, cos_th - mm)
    cos_th_m = jnp.where(cos_th - th <= 0.0, cos_th - mm, cos_th_m)
    onehot = (labels[:, None] ==
              jnp.arange(weight.shape[0], dtype=jnp.int32)[None, :]
              ).astype(cos_th.dtype)
    return (onehot * cos_th_m + (1.0 - onehot) * cos_th) * s


if __name__ == "__main__":
    key = jax.random.PRNGKey(0)

    def make_inputs(B, D, C):
        k_emb, k_w, k_lab = jax.random.split(key, 3)
        emb = jax.random.normal(k_emb, (B, D), dtype=jnp.float32)
        xavier_std = math.sqrt(2.0 / (D + C))          # nn.init.xavier_normal_
        w = xavier_std * jax.random.normal(k_w, (C, D), dtype=jnp.float32)
        lab = jax.random.randint(k_lab, (B,), 0, C, dtype=jnp.int32)
        return emb, w, lab

    # Config 1: C a multiple of the class tile.  Config 2: ragged C (exercises
    # the zero-padded class path).  f32 stream for strict comparison.
    for (B, D, C) in ((8, 64, 512), (8, 64, 300)):
        emb, w, lab = make_inputs(B, D, C)
        for easy in (False, True):
            out = jax.block_until_ready(
                arcface_forward(emb, lab, w, s=64.0, m=0.5, easy_margin=easy,
                                use_bf16=False))
            assert out.shape == (B, C) and out.dtype == jnp.float32
            ref = _reference(emb, lab, w, s=64.0, m=0.5, easy_margin=easy)
            diff = jnp.abs(out - ref)
            bad = int(jnp.sum(diff > 5e-3))
            # A stray entry may legitimately differ if cos(theta) lands within
            # float rounding of a margin threshold (branch tie).
            assert bad <= 2, (B, D, C, easy, bad, float(jnp.max(diff)))

    # Default path: bf16 weight/embedding stream.  bf16 rounding of cos(theta)
    # can flip the margin branch on the label column, so compare off-label
    # logits loosely and only sanity-check the label column for finiteness.
    B, D, C = 8, 64, 512
    emb, w, lab = make_inputs(B, D, C)
    out_bf16 = jax.block_until_ready(arcface_forward(emb, lab, w, s=64.0, m=0.5))
    assert out_bf16.shape == (B, C) and bool(jnp.all(jnp.isfinite(out_bf16)))
    ref = _reference(emb, lab, w, s=64.0, m=0.5, easy_margin=False)
    onehot = lab[:, None] == jnp.arange(C, dtype=jnp.int32)[None, :]
    off_label_diff = jnp.where(onehot, 0.0, jnp.abs(out_bf16 - ref))
    assert float(jnp.max(off_label_diff)) < 1.0, float(jnp.max(off_label_diff))

    print("KERNEL_OK")
</pallas_src>

<mosaic_0001>
module attributes {stable_mosaic.version = 11 : i64} {
  func.func @_arcface_kernel(%arg0: i32, %arg1: i32, %arg2: memref<8x1xi32, #tpu.memory_space<vmem>>, %arg3: memref<8x64xf32, #tpu.memory_space<vmem>>, %arg4: memref<256x64xf32, #tpu.memory_space<vmem>>, %arg5: memref<8x256xf32, #tpu.memory_space<vmem>>) attributes {dimension_semantics = [#tpu.dimension_semantics<parallel>, #tpu.dimension_semantics<parallel>], iteration_bounds = array<i64: 2, 1>, scalar_prefetch = 0 : i64, scratch_operands = 0 : i64, tpu.core_type = #tpu.core_type<tc>, window_params = [{transform_indices = @transform_0, window_bounds = array<i64: 8, 1>}, {transform_indices = @transform_1, window_bounds = array<i64: 8, 64>}, {transform_indices = @transform_2, window_bounds = array<i64: 256, 64>}, {transform_indices = @transform_3, window_bounds = array<i64: 8, 256>}]} {
    %c0 = arith.constant 0 : index
    %c0_0 = arith.constant 0 : index
    %0 = vector.load %arg3[%c0, %c0_0] : memref<8x64xf32, #tpu.memory_space<vmem>>, vector<8x64xf32>
    %c0_1 = arith.constant 0 : index
    %c0_2 = arith.constant 0 : index
    %1 = vector.load %arg4[%c0_1, %c0_2] : memref<256x64xf32, #tpu.memory_space<vmem>>, vector<256x64xf32>
    %cst = arith.constant dense<0.000000e+00> : vector<8x256xf32>
    %2 = tpu.matmul %0, %1, %cst {dimension_numbers = #tpu.dot_dimension_numbers<[1], [1], [0], [0], [0, 0, 1, 0], [], []>} : vector<8x64xf32>, vector<256x64xf32>, vector<8x256xf32> -> vector<8x256xf32>
    %cst_3 = arith.constant 1.000000e+00 : f32
    %3 = vector.broadcast %cst_3 : f32 to vector<1x64xf32>
    %4 = arith.mulf %1, %1 : vector<256x64xf32>
    %cst_4 = arith.constant dense<0.000000e+00> : vector<1x256xf32>
    %5 = tpu.matmul %3, %4, %cst_4 {dimension_numbers = #tpu.dot_dimension_numbers<[1], [1], [0], [0], [0, 0, 1, 0], [], []>} : vector<1x64xf32>, vector<256x64xf32>, vector<1x256xf32> -> vector<1x256xf32>
    %cst_5 = arith.constant 1.000000e-24 : f32
    %6 = vector.broadcast %cst_5 : f32 to vector<1x256xf32>
    %7 = arith.maximumf %5, %6 : vector<1x256xf32>
    %8 = math.rsqrt %7 : vector<1x256xf32>
    %9 = vector.broadcast %8 : vector<1x256xf32> to vector<8x256xf32>
    %10 = arith.mulf %2, %9 : vector<8x256xf32>
    %cst_6 = arith.constant -1.000000e+00 : f32
    %cst_7 = arith.constant 1.000000e+00 : f32
    %11 = vector.broadcast %cst_6 : f32 to vector<8x256xf32>
    %12 = arith.maximumf %11, %10 : vector<8x256xf32>
    %13 = vector.broadcast %cst_7 : f32 to vector<8x256xf32>
    %14 = arith.minimumf %13, %12 : vector<8x256xf32>
    %15 = arith.mulf %14, %14 : vector<8x256xf32>
    %cst_8 = arith.constant 1.000000e+00 : f32
    %16 = vector.broadcast %cst_8 : f32 to vector<8x256xf32>
    %17 = arith.subf %16, %15 : vector<8x256xf32>
    %cst_9 = arith.constant 0.000000e+00 : f32
    %18 = vector.broadcast %cst_9 : f32 to vector<8x256xf32>
    %19 = arith.maximumf %17, %18 : vector<8x256xf32>
    %20 = math.sqrt %19 : vector<8x256xf32>
    %cst_10 = arith.constant 0.87758255 : f32
    %21 = vector.broadcast %cst_10 : f32 to vector<8x256xf32>
    %22 = arith.mulf %14, %21 : vector<8x256xf32>
    %cst_11 = arith.constant 0.47942555 : f32
    %23 = vector.broadcast %cst_11 : f32 to vector<8x256xf32>
    %24 = arith.mulf %20, %23 : vector<8x256xf32>
    %25 = arith.subf %22, %24 : vector<8x256xf32>
    %cst_12 = arith.constant -0.87758255 : f32
    %26 = vector.broadcast %cst_12 : f32 to vector<8x256xf32>
    %27 = arith.cmpf ogt, %14, %26 : vector<8x256xf32>
    %cst_13 = arith.constant 0.239712775 : f32
    %28 = vector.broadcast %cst_13 : f32 to vector<8x256xf32>
    %29 = arith.subf %14, %28 : vector<8x256xf32>
    %30 = arith.select %27, %25, %29 : vector<8x256xi1>, vector<8x256xf32>
    %c0_14 = arith.constant 0 : index
    %c0_15 = arith.constant 0 : index
    %31 = vector.load %arg2[%c0_14, %c0_15] : memref<8x1xi32, #tpu.memory_space<vmem>>, vector<8x1xi32>
    %32 = tpu.iota {dimensions = array<i32: 1>} : vector<8x256xi32>
    %c256_i32 = arith.constant 256 : i32
    %33 = arith.muli %arg0, %c256_i32 : i32
    %34 = vector.broadcast %33 : i32 to vector<8x256xi32>
    %35 = arith.addi %32, %34 : vector<8x256xi32>
    %36 = vector.broadcast %31 : vector<8x1xi32> to vector<8x256xi32>
    %37 = arith.cmpi eq, %35, %36 : vector<8x256xi32>
    %38 = arith.select %37, %30, %14 : vector<8x256xi1>, vector<8x256xf32>
    %cst_16 = arith.constant 6.400000e+01 : f32
    %39 = vector.broadcast %cst_16 : f32 to vector<8x256xf32>
    %40 = arith.mulf %38, %39 : vector<8x256xf32>
    %c0_17 = arith.constant 0 : index
    %c0_18 = arith.constant 0 : index
    %41 = vector.load %arg5[%c0_17, %c0_18] : memref<8x256xf32, #tpu.memory_space<vmem>>, vector<8x256xf32>
    tpu.vector_store %arg5[%c0_17, %c0_18], %40 {strides = array<i32>} : memref<8x256xf32, #tpu.memory_space<vmem>>, vector<8x256xf32>,
    return
  }
  func.func @transform_0(%arg0: i32, %arg1: i32) -> (i32, i32) {
    %c0_i32 = arith.constant 0 : i32
    %c0_i32_0 = arith.constant 0 : i32
    return %arg1, %c0_i32 : i32, i32
  }
  func.func @transform_1(%arg0: i32, %arg1: i32) -> (i32, i32) {
    %c0_i32 = arith.constant 0 : i32
    %c0_i32_0 = arith.constant 0 : i32
    return %arg1, %c0_i32 : i32, i32
  }
  func.func @transform_2(%arg0: i32, %arg1: i32) -> (i32, i32) {
    %c0_i32 = arith.constant 0 : i32
    %c0_i32_0 = arith.constant 0 : i32
    return %arg0, %c0_i32 : i32, i32
  }
  func.func @transform_3(%arg0: i32, %arg1: i32) -> (i32, i32) {
    %c0_i32 = arith.constant 0 : i32
    return %arg1, %arg0 : i32, i32
  }
}

</mosaic_0001>

<llo_original>
// kernel: tpu_custom_call.1
$region0: #{tpu_custom_call.1}
  #allocation0 [shape = 'u32[]', space=smem, size = 0x4, offset = 0x4, fixed_abs, tag = 'smem constant byte address 0x4 - core index']
  #allocation1 [shape = 'u32[144,128]{1,0:T(1,128)}', space=vmem, size = 0x12000, scoped, tag = 'internal scratch']
  %s0 = inlined_call_operand.vmem [shape: s32[8,1], index: 0, kind: input, shape index: {}]
  %s1 = inlined_call_operand.vmem [shape: f32[8,64], index: 1, kind: input, shape index: {}]
  %s2 = inlined_call_operand.vmem [shape: f32[512,64], index: 2, kind: input, shape index: {}]
  %s3 = inlined_call_operand.hbm [shape: f32[8,512], index: 3, kind: output, shape index: {}]
  %s4 = sld [smem:[#allocation0]]
  $region45: #{tpu_custom_call.1} parent=0
    _
  %s6 = ssub.s32 1, %s4
  %s7 = scalar_select 0, %s6, %s4
  $region1: #{tpu_custom_call.1} parent=0
    #allocation2 [shape = 'u8[16384]{0}', space=vmem, size = 0x4000, scoped, tag = 'output window, operand 0']
    #allocation3 [shape = 's32[2]{0}', space=sflag, size = 0x8, scoped, tag = 'scoped memory for tpu_custom_call.1']
    %8 = vsyncpa [#allocation3], 0
    %s9 = scalar_lea.sflag [#allocation3], 1
    %10 = vsyncpa %s9, 0
    loop: start=0, step=1, limit=4
    $region2: #{tpu_custom_call.1} parent=1 // loop_pre_header
      _
    $region3: #{tpu_custom_call.1} parent=1 // loop_header
      %s12 = sphi 0, %s16
      %p13 = scmp.ge.s32.totalorder %s12, 4
      %s19 = sphi 0, %s31
      %s20 = sphi 0, %s27
      %s21 = sphi 0, %s19
      %s22 = sphi 0, %s20
      %s23 = sphi 0, %s21
      %s24 = sphi 0, %s22
      %s34 = sphi 0, %s36
      %s37 = sphi 0, %s34
      %s38 = sphi 0, %s37
      %s54 = sphi 0, %s38
      %s60 = sphi 0, %s62
      %s63 = sphi 0, %s60
      %s64 = sphi 0, %s63
      %s80 = sphi 0, %s64
      %s86 = sphi 0, %s88
      %s89 = sphi 0, %s86
      %s90 = sphi 0, %s89
      %s106 = sphi 0, %s90
      %s114 = sphi 0, %s116
      %s117 = sphi 0, %s114
      %s118 = sphi 0, %s117
      %s134 = sphi 0, %s118
    $region4: #{tpu_custom_call.1} parent=1 // loop_header_branch
      %15 = sbr.rel (%p13) target = $region8
    $region5: #{tpu_custom_call.1} parent=1 // loop_body
      %s17 = ssub.s32 %s12, 1
      %s18 = ssub.s32 %s12, 2
      %s25 = sadd.s32 1, %s20
      %p26 = scmp.ge.s32.totalorder %s25, 1
      %s27 = scalar_select %p26, 0, %s25
      %s28 = sadd.s32 1, %s19
      %s29 = scalar_select %p26, %s28, %s19
      %p30 = scmp.ge.s32.totalorder %s29, 2
      %s31 = scalar_select %p30, 0, %s29
      %s32 = ssub.s32 %s20, %s27
      %p33 = scmp.eq.s32.totalorder %s32, 0
      %s35 = sadd.s32 %s34, 1
      %s36 = scalar_select %p33, %s34, %s35
      %p39 = pneg %p33
      %p40 = scmp.eq.s32.totalorder %s12, 1
      %p41 = por %p39, %p40
      %p42 = scmp.ne.s32.totalorder %s34, %s37
      %p43 = scmp.eq.s32.totalorder %s12, 0
      %p44 = por %p42, %p43
      %p45 = scmp.ne.s32.totalorder %s34, %s37
      %p46 = scmp.eq.s32.totalorder %s17, 1
      %p47 = por %p45, %p46
      %p48 = scmp.ne.s32.totalorder %s37, %s38
      %p49 = scmp.eq.s32.totalorder %s17, 0
      %p50 = por %p48, %p49
      %p51 = scmp.ne.s32.totalorder %s37, %s38
      %p52 = scmp.eq.s32.totalorder %s18, 1
      %p53 = por %p51, %p52
      %p55 = scmp.ne.s32.totalorder %s38, %s54
      %p56 = scmp.eq.s32.totalorder %s18, 0
      %p57 = por %p55, %p56
      %s58 = ssub.s32 %s20, %s27
      %p59 = scmp.eq.s32.totalorder %s58, 0
      %s61 = sadd.s32 %s60, 1
      %s62 = scalar_select %p59, %s60, %s61
      %p65 = pneg %p59
      %p66 = scmp.eq.s32.totalorder %s12, 1
      %p67 = por %p65, %p66
      %p68 = scmp.ne.s32.totalorder %s60, %s63
      %p69 = scmp.eq.s32.totalorder %s12, 0
      %p70 = por %p68, %p69
      %p71 = scmp.ne.s32.totalorder %s60, %s63
      %p72 = scmp.eq.s32.totalorder %s17, 1
      %p73 = por %p71, %p72
      %p74 = scmp.ne.s32.totalorder %s63, %s64
      %p75 = scmp.eq.s32.totalorder %s17, 0
      %p76 = por %p74, %p75
      %p77 = scmp.ne.s32.totalorder %s63, %s64
      %p78 = scmp.eq.s32.totalorder %s18, 1
      %p79 = por %p77, %p78
      %p81 = scmp.ne.s32.totalorder %s64, %s80
      %p82 = scmp.eq.s32.totalorder %s18, 0
      %p83 = por %p81, %p82
      %s84 = ssub.s32 %s19, %s31
      %p85 = scmp.eq.s32.totalorder %s84, 0
      %s87 = sadd.s32 %s86, 1
      %s88 = scalar_select %p85, %s86, %s87
      %p91 = pneg %p85
      %p92 = scmp.eq.s32.totalorder %s12, 1
      %p93 = por %p91, %p92
      %p94 = scmp.ne.s32.totalorder %s86, %s89
      %p95 = scmp.eq.s32.totalorder %s12, 0
      %p96 = por %p94, %p95
      %p97 = scmp.ne.s32.totalorder %s86, %s89
      %p98 = scmp.eq.s32.totalorder %s17, 1
      %p99 = por %p97, %p98
      %p100 = scmp.ne.s32.totalorder %s89, %s90
      %p101 = scmp.eq.s32.totalorder %s17, 0
      %p102 = por %p100, %p101
      %p103 = scmp.ne.s32.totalorder %s89, %s90
      %p104 = scmp.eq.s32.totalorder %s18, 1
      %p105 = por %p103, %p104
      %p107 = scmp.ne.s32.totalorder %s90, %s106
      %p108 = scmp.eq.s32.totalorder %s18, 0
      %p109 = por %p107, %p108
      %s110 = ssub.s32 %s20, %s27
      %s111 = ssub.s32 %s19, %s31
      %s112 = sor.u32 %s110, %s111
      %p113 = scmp.eq.s32.totalorder %s112, 0
      %s115 = sadd.s32 %s114, 1
      %s116 = scalar_select %p113, %s114, %s115
      %p119 = pneg %p113
      %p120 = scmp.eq.s32.totalorder %s12, 1
      %p121 = por %p119, %p120
      %p122 = scmp.ne.s32.totalorder %s114, %s117
      %p123 = scmp.eq.s32.totalorder %s12, 0
      %p124 = por %p122, %p123
      %p125 = scmp.ne.s32.totalorder %s114, %s117
      %p126 = scmp.eq.s32.totalorder %s17, 1
      %p127 = por %p125, %p126
      %p128 = scmp.ne.s32.totalorder %s117, %s118
      %p129 = scmp.eq.s32.totalorder %s17, 0
      %p130 = por %p128, %p129
      %p131 = scmp.ne.s32.totalorder %s117, %s118
      %p132 = scmp.eq.s32.totalorder %s18, 1
      %p133 = por %p131, %p132
      %p135 = scmp.ne.s32.totalorder %s118, %s134
      %p136 = scmp.eq.s32.totalorder %s18, 0
      %p137 = por %p135, %p136
      %p138 = scmp.le.s32.totalorder 1, %s12
      %p139 = scmp.lt.s32.totalorder %s12, 3
      %p140 = pnand %p138, %p139
      %p141 = pneg %p140
      // Predicated region
      $region9: #{tpu_custom_call.1} parent=5 // pred_check
        _
      $region10: #{tpu_custom_call.1} parent=5 // pred_check_branch
        %143 = sbr.rel (%p140) target = $region12
      $region11: #{tpu_custom_call.1} parent=5 // pred_region
        %s144 = ssub.s32 %s12, 1
        // Predicated region
        $region13: #{tpu_custom_call.1} parent=11 // pred_check
          %p145 = pneg %p50
        $region14: #{tpu_custom_call.1} parent=11 // pred_check_branch
          %147 = sbr.rel (%p145) target = $region16
        $region15: #{tpu_custom_call.1} parent=11 // pred_region
          %p148 = scmp.lt.s32.totalorder %s22, 0
          %s149 = scalar_select %p148, %s22, 0
          %s150 = smul.addr %s149, 8
          %s151 = scalar_lea.vmem %s0, %s150
        $region16: #{tpu_custom_call.1} parent=11 // pred_fallthru
          _
        // Predicated region
        $region17: #{tpu_custom_call.1} parent=11 // pred_check
          %p152 = pneg %p76
        $region18: #{tpu_custom_call.1} parent=11 // pred_check_branch
          %154 = sbr.rel (%p152) target = $region20
        $region19: #{tpu_custom_call.1} parent=11 // pred_region
          %p155 = scmp.lt.s32.totalorder %s22, 0
          %s156 = scalar_select %p155, %s22, 0
          %s157 = smul.addr %s156, 8
          %s158 = scalar_lea.vmem %s1, %s157
        $region20: #{tpu_custom_call.1} parent=11 // pred_fallthru
          _
      $region12: #{tpu_custom_call.1} parent=5 // pred_fallthru
        _
      %p159 = scmp.lt.s32.totalorder %s12, 2
      // Predicated region
      $region21: #{tpu_custom_call.1} parent=5 // pred_check
        %p160 = pneg %p159
      $region22: #{tpu_custom_call.1} parent=5 // pred_check_branch
        %162 = sbr.rel (%p160) target = $region24
      $region23: #{tpu_custom_call.1} parent=5 // pred_region
        // Predicated region
        $region25: #{tpu_custom_call.1} parent=23 // pred_check
          %p163 = pneg %p96
        $region26: #{tpu_custom_call.1} parent=23 // pred_check_branch
          %165 = sbr.rel (%p163) target = $region28
        $region27: #{tpu_custom_call.1} parent=23 // pred_region
          %s166 = smul.u32 32, %s19
          %p167 = scmp.lt.s32.totalorder %s166, 63
          %s168 = scalar_select %p167, %s166, 63
          %s169 = smul.addr %s168, 8
          %s170 = scalar_lea.vmem %s2, %s169
          %s171 = smul.u32 32, %s19
        $region28: #{tpu_custom_call.1} parent=23 // pred_fallthru
          _
      $region24: #{tpu_custom_call.1} parent=5 // pred_fallthru
        _
      %p172 = scmp.le.s32.totalorder 1, %s12
      %p173 = scmp.lt.s32.totalorder %s12, 3
      %p174 = pnand %p172, %p173
      %p175 = pneg %p174
      // Predicated region
      $region29: #{tpu_custom_call.1} parent=5 // pred_check
        _
      $region30: #{tpu_custom_call.1} parent=5 // pred_check_branch
        %177 = sbr.rel (%p174) target = $region32
      $region31: #{tpu_custom_call.1} parent=5 // pred_region
        %s178 = ssub.s32 %s12, 1
        %p179 = scmp.lt.s32.totalorder %s22, 0
        %s180 = scalar_select %p179, %s22, 0
        %s181 = smul.addr %s180, 8
        %s182 = scalar_lea.vmem %s0, %s181
        %p183 = pneg %p50
        %p184 = pneg %p47
        %p185 = scmp.lt.s32.totalorder %s22, 0
        %s186 = scalar_select %p185, %s22, 0
        %s187 = smul.addr %s186, 8
        %s188 = scalar_lea.vmem %s1, %s187
        %p189 = pneg %p76
        %p190 = pneg %p73
        %s191 = smul.u32 32, %s21
        %p192 = scmp.lt.s32.totalorder %s191, 63
        %s193 = scalar_select %p192, %s191, 63
        %s194 = smul.addr %s193, 8
        %s195 = scalar_lea.vmem %s2, %s194
        %p196 = pneg %p102
        %p197 = pneg %p99
        %p198 = pneg %p130
        %p199 = pneg %p127
        %s200 = sand.u32 %s117, 1
        %s201 = scalar_lea.sflag [#allocation3], %s200
        %s202 = sand.u32 %s117, 1
        %s203 = smul.addr %s202, 16
        %s204 = scalar_lea.vmem [#allocation2], %s203
        %p205 = scmp.lt.s32.totalorder %s22, 0
        %s206 = scalar_select %p205, %s22, 0
        %s207 = smul.addr %s206, 8
        %s208 = scalar_lea.vmem %s0, %s207
        %p209 = scmp.lt.s32.totalorder %s22, 0
        %s210 = scalar_select %p209, %s22, 0
        %s211 = smul.addr %s210, 8
        %s212 = scalar_lea.vmem %s1, %s211
        %s213 = smul.u32 32, %s21
        %p214 = scmp.lt.s32.totalorder %s213, 63
        %s215 = scalar_select %p214, %s213, 63
        %s216 = smul.addr %s215, 8
        %s217 = scalar_lea.vmem %s2, %s216
        %s218 = smul.u32 32, %s21
        %s219 = smul.u32 2, %s21
        %v220 = vld [vmem:[%s212] sm:$0xff]
        %v221 = vld [vmem:[%s217] sm:$0xff]
        %v222 = vld [vmem:[%s217 + $0x8] sm:$0xff]
        %v223 = vld [vmem:[%s217 + $0x10] sm:$0xff]
        %v224 = vld [vmem:[%s217 + $0x18] sm:$0xff]
        %v225 = vld [vmem:[%s217 + $0x20] sm:$0xff]
        %v226 = vld [vmem:[%s217 + $0x28] sm:$0xff]
        %v227 = vld [vmem:[%s217 + $0x30] sm:$0xff]
        %v228 = vld [vmem:[%s217 + $0x38] sm:$0xff]
        %v229 = vld [vmem:[%s217 + $0x40] sm:$0xff]
        %v230 = vld [vmem:[%s217 + $0x48] sm:$0xff]
        %v231 = vld [vmem:[%s217 + $0x50] sm:$0xff]
        %v232 = vld [vmem:[%s217 + $0x58] sm:$0xff]
        %v233 = vld [vmem:[%s217 + $0x60] sm:$0xff]
        %v234 = vld [vmem:[%s217 + $0x68] sm:$0xff]
        %v235 = vld [vmem:[%s217 + $0x70] sm:$0xff]
        %v236 = vld [vmem:[%s217 + $0x78] sm:$0xff]
        %v237 = vld [vmem:[%s217 + $0x80] sm:$0xff]
        %v238 = vld [vmem:[%s217 + $0x88] sm:$0xff]
        %v239 = vld [vmem:[%s217 + $0x90] sm:$0xff]
        %v240 = vld [vmem:[%s217 + $0x98] sm:$0xff]
        %v241 = vld [vmem:[%s217 + $0xa0] sm:$0xff]
        %v242 = vld [vmem:[%s217 + $0xa8] sm:$0xff]
        %v243 = vld [vmem:[%s217 + $0xb0] sm:$0xff]
        %v244 = vld [vmem:[%s217 + $0xb8] sm:$0xff]
        %v245 = vld [vmem:[%s217 + $0xc0] sm:$0xff]
        %v246 = vld [vmem:[%s217 + $0xc8] sm:$0xff]
        %v247 = vld [vmem:[%s217 + $0xd0] sm:$0xff]
        %v248 = vld [vmem:[%s217 + $0xd8] sm:$0xff]
        %v249 = vld [vmem:[%s217 + $0xe0] sm:$0xff]
        %v250 = vld [vmem:[%s217 + $0xe8] sm:$0xff]
        %v251 = vld [vmem:[%s217 + $0xf0] sm:$0xff]
        %v252 = vld [vmem:[%s217 + $0xf8] sm:$0xff]
        %vm253 = vcmask 523264
        %v255 = vsel %vm253, %v220, 0
        %v258 = vsel %vm253, %v221, 0
        %v261 = vsel %vm253, %v222, 0
        %v264 = vsel %vm253, %v223, 0
        %v267 = vsel %vm253, %v224, 0
        %v270 = vsel %vm253, %v225, 0
        %v273 = vsel %vm253, %v226, 0
        %v276 = vsel %vm253, %v227, 0
        %v279 = vsel %vm253, %v228, 0
        %v282 = vsel %vm253, %v229, 0
        %v285 = vsel %vm253, %v230, 0
        %v288 = vsel %vm253, %v231, 0
        %v291 = vsel %vm253, %v232, 0
        %v294 = vsel %vm253, %v233, 0
        %v297 = vsel %vm253, %v234, 0
        %v300 = vsel %vm253, %v235, 0
        %v303 = vsel %vm253, %v236, 0
        %v306 = vsel %vm253, %v237, 0
        %v309 = vsel %vm253, %v238, 0
        %v312 = vsel %vm253, %v239, 0
        %v315 = vsel %vm253, %v240, 0
        %v318 = vsel %vm253, %v241, 0
        %v321 = vsel %vm253, %v242, 0
        %v324 = vsel %vm253, %v243, 0
        %v327 = vsel %vm253, %v244, 0
        %v330 = vsel %vm253, %v245, 0
        %v333 = vsel %vm253, %v246, 0
        %v336 = vsel %vm253, %v247, 0
        %v339 = vsel %vm253, %v248, 0
        %v342 = vsel %vm253, %v249, 0
        %v345 = vsel %vm253, %v250, 0
        %v348 = vsel %vm253, %v251, 0
        %v351 = vsel %vm253, %v252, 0
        %353 = vmatprep.subr.mxu0 0.0
        %354 = vmatpush1.xpose.msra.mxu0 %v303
        %355 = vmatprep.subr.mxu0 0.0
        %356 = vmatpush1.xpose.msra.mxu0 %v300
        %357 = vmatprep.subr.mxu0 0.0
        %358 = vmatpush1.xpose.msra.mxu0 %v297
        %359 = vmatprep.subr.mxu0 0.0
        %360 = vmatpush1.xpose.msra.mxu0 %v294
        %361 = vmatprep.subr.mxu0 0.0
        %362 = vmatpush1.xpose.msra.mxu0 %v291
        %363 = vmatprep.subr.mxu0 0.0
        %364 = vmatpush1.xpose.msra.mxu0 %v288
        %365 = vmatprep.subr.mxu0 0.0
        %366 = vmatpush1.xpose.msra.mxu0 %v285
        %367 = vmatprep.subr.mxu0 0.0
        %368 = vmatpush1.xpose.msra.mxu0 %v282
        %369 = vmatprep.subr.mxu0 0.0
        %370 = vmatpush1.xpose.msra.mxu0 %v279
        %371 = vmatprep.subr.mxu0 0.0
        %372 = vmatpush1.xpose.msra.mxu0 %v276
        %373 = vmatprep.subr.mxu0 0.0
        %374 = vmatpush1.xpose.msra.mxu0 %v273
        %375 = vmatprep.subr.mxu0 0.0
        %376 = vmatpush1.xpose.msra.mxu0 %v270
        %377 = vmatprep.subr.mxu0 0.0
        %378 = vmatpush1.xpose.msra.mxu0 %v267
        %379 = vmatprep.subr.mxu0 0.0
        %380 = vmatpush1.xpose.msra.mxu0 %v264
        %381 = vmatprep.subr.mxu0 0.0
        %382 = vmatpush1.xpose.msra.mxu0 %v261
        %383 = vmatprep.subr.mxu0 0.0
        %384 = vmatpush1.xpose.msra.mxu0 %v258
        %385 = vmatprep.subr.mxu0 0.0
        %386 = vmatpush2.xpose.msra.mxu0 %v351
        %387 = vmatprep.subr.mxu0 0.0
        %388 = vmatpush2.xpose.msra.mxu0 %v348
        %389 = vmatprep.subr.mxu0 0.0
        %390 = vmatpush2.xpose.msra.mxu0 %v345
        %391 = vmatprep.subr.mxu0 0.0
        %392 = vmatpush2.xpose.msra.mxu0 %v342
        %393 = vmatprep.subr.mxu0 0.0
        %394 = vmatpush2.xpose.msra.mxu0 %v339
        %395 = vmatprep.subr.mxu0 0.0
        %396 = vmatpush2.xpose.msra.mxu0 %v336
        %397 = vmatprep.subr.mxu0 0.0
        %398 = vmatpush2.xpose.msra.mxu0 %v333
        %399 = vmatprep.subr.mxu0 0.0
        %400 = vmatpush2.xpose.msra.mxu0 %v330
        %401 = vmatprep.subr.mxu0 0.0
        %402 = vmatpush2.xpose.msra.mxu0 %v327
        %403 = vmatprep.subr.mxu0 0.0
        %404 = vmatpush2.xpose.msra.mxu0 %v324
        %405 = vmatprep.subr.mxu0 0.0
        %406 = vmatpush2.xpose.msra.mxu0 %v321
        %407 = vmatprep.subr.mxu0 0.0
        %408 = vmatpush2.xpose.msra.mxu0 %v318
        %409 = vmatprep.subr.mxu0 0.0
        %410 = vmatpush2.xpose.msra.mxu0 %v315
        %411 = vmatprep.subr.mxu0 0.0
        %412 = vmatpush2.xpose.msra.mxu0 %v312
        %413 = vmatprep.subr.mxu0 0.0
        %414 = vmatpush2.xpose.msra.mxu0 %v309
        %415 = vmatprep.subr.mxu0 0.0
        %416 = vmatpush2.xpose.msra.mxu0 %v306
        %417 = vmatprep.mubr.f32.mxu0 0.0
        %418 = vmatmul.mubr.f32.gmra.mxu0 %v255
        %v419 = vpop.f32.mrf.mxu0
        %v420 = vadd.f32 0.0, %v419
        %v421 = vpop.f32.mrf.mxu0
        %v422 = vadd.f32 0.0, %v421
        %423 = vdwg.mxu0
        %v424 = vmul.f32 %v221, %v221
        %v425 = vmul.f32 %v222, %v222
        %v426 = vmul.f32 %v223, %v223
        %v427 = vmul.f32 %v224, %v224
        %v428 = vmul.f32 %v225, %v225
        %v429 = vmul.f32 %v226, %v226
        %v430 = vmul.f32 %v227, %v227
        %v431 = vmul.f32 %v228, %v228
        %v432 = vmul.f32 %v229, %v229
        %v433 = vmul.f32 %v230, %v230
        %v434 = vmul.f32 %v231, %v231
        %v435 = vmul.f32 %v232, %v232
        %v436 = vmul.f32 %v233, %v233
        %v437 = vmul.f32 %v234, %v234
        %v438 = vmul.f32 %v235, %v235
        %v439 = vmul.f32 %v236, %v236
        %v440 = vmul.f32 %v237, %v237
        %v441 = vmul.f32 %v238, %v238
        %v442 = vmul.f32 %v239, %v239
        %v443 = vmul.f32 %v240, %v240
        %v444 = vmul.f32 %v241, %v241
        %v445 = vmul.f32 %v242, %v242
        %v446 = vmul.f32 %v243, %v243
        %v447 = vmul.f32 %v244, %v244
        %v448 = vmul.f32 %v245, %v245
        %v449 = vmul.f32 %v246, %v246
        %v450 = vmul.f32 %v247, %v247
        %v451 = vmul.f32 %v248, %v248
        %v452 = vmul.f32 %v249, %v249
        %v453 = vmul.f32 %v250, %v250
        %v454 = vmul.f32 %v251, %v251
        %v455 = vmul.f32 %v252, %v252
        %v457 = vsel %vm253, 1.0, 0
        %v460 = vsel %vm253, %v424, 0
        %v463 = vsel %vm253, %v425, 0
        %v466 = vsel %vm253, %v426, 0
        %v469 = vsel %vm253, %v427, 0
        %v472 = vsel %vm253, %v428, 0
        %v475 = vsel %vm253, %v429, 0
        %v478 = vsel %vm253, %v430, 0
        %v481 = vsel %vm253, %v431, 0
        %v484 = vsel %vm253, %v432, 0
        %v487 = vsel %vm253, %v433, 0
        %v490 = vsel %vm253, %v434, 0
        %v493 = vsel %vm253, %v435, 0
        %v496 = vsel %vm253, %v436, 0
        %v499 = vsel %vm253, %v437, 0
        %v502 = vsel %vm253, %v438, 0
        %v505 = vsel %vm253, %v439, 0
        %v508 = vsel %vm253, %v440, 0
        %v511 = vsel %vm253, %v441, 0
        %v514 = vsel %vm253, %v442, 0
        %v517 = vsel %vm253, %v443, 0
        %v520 = vsel %vm253, %v444, 0
        %v523 = vsel %vm253, %v445, 0
        %v526 = vsel %vm253, %v446, 0
        %v529 = vsel %vm253, %v447, 0
        %v532 = vsel %vm253, %v448, 0
        %v535 = vsel %vm253, %v449, 0
        %v538 = vsel %vm253, %v450, 0
        %v541 = vsel %vm253, %v451, 0
        %v544 = vsel %vm253, %v452, 0
        %v547 = vsel %vm253, %v453, 0
        %v550 = vsel %vm253, %v454, 0
        %v553 = vsel %vm253, %v455, 0
        %555 = vmatprep.subr.mxu0 0.0
        %556 = vmatpush1.xpose.msra.mxu0 %v505
        %557 = vmatprep.subr.mxu0 0.0
        %558 = vmatpush1.xpose.msra.mxu0 %v502
        %559 = vmatprep.subr.mxu0 0.0
        %560 = vmatpush1.xpose.msra.mxu0 %v499
        %561 = vmatprep.subr.mxu0 0.0
        %562 = vmatpush1.xpose.msra.mxu0 %v496
        %563 = vmatprep.subr.mxu0 0.0
        %564 = vmatpush1.xpose.msra.mxu0 %v493
        %565 = vmatprep.subr.mxu0 0.0
        %566 = vmatpush1.xpose.msra.mxu0 %v490
        %567 = vmatprep.subr.mxu0 0.0
        %568 = vmatpush1.xpose.msra.mxu0 %v487
        %569 = vmatprep.subr.mxu0 0.0
        %570 = vmatpush1.xpose.msra.mxu0 %v484
        %571 = vmatprep.subr.mxu0 0.0
        %572 = vmatpush1.xpose.msra.mxu0 %v481
        %573 = vmatprep.subr.mxu0 0.0
        %574 = vmatpush1.xpose.msra.mxu0 %v478
        %575 = vmatprep.subr.mxu0 0.0
        %576 = vmatpush1.xpose.msra.mxu0 %v475
        %577 = vmatprep.subr.mxu0 0.0
        %578 = vmatpush1.xpose.msra.mxu0 %v472
        %579 = vmatprep.subr.mxu0 0.0
        %580 = vmatpush1.xpose.msra.mxu0 %v469
        %581 = vmatprep.subr.mxu0 0.0
        %582 = vmatpush1.xpose.msra.mxu0 %v466
        %583 = vmatprep.subr.mxu0 0.0
        %584 = vmatpush1.xpose.msra.mxu0 %v463
        %585 = vmatprep.subr.mxu0 0.0
        %586 = vmatpush1.xpose.msra.mxu0 %v460
        %587 = vmatprep.subr.mxu0 0.0
        %588 = vmatpush2.xpose.msra.mxu0 %v553
        %589 = vmatprep.subr.mxu0 0.0
        %590 = vmatpush2.xpose.msra.mxu0 %v550
        %591 = vmatprep.subr.mxu0 0.0
        %592 = vmatpush2.xpose.msra.mxu0 %v547
        %593 = vmatprep.subr.mxu0 0.0
        %594 = vmatpush2.xpose.msra.mxu0 %v544
        %595 = vmatprep.subr.mxu0 0.0
        %596 = vmatpush2.xpose.msra.mxu0 %v541
        %597 = vmatprep.subr.mxu0 0.0
        %598 = vmatpush2.xpose.msra.mxu0 %v538
        %599 = vmatprep.subr.mxu0 0.0
        %600 = vmatpush2.xpose.msra.mxu0 %v535
        %601 = vmatprep.subr.mxu0 0.0
        %602 = vmatpush2.xpose.msra.mxu0 %v532
        %603 = vmatprep.subr.mxu0 0.0
        %604 = vmatpush2.xpose.msra.mxu0 %v529
        %605 = vmatprep.subr.mxu0 0.0
        %606 = vmatpush2.xpose.msra.mxu0 %v526
        %607 = vmatprep.subr.mxu0 0.0
        %608 = vmatpush2.xpose.msra.mxu0 %v523
        %609 = vmatprep.subr.mxu0 0.0
        %610 = vmatpush2.xpose.msra.mxu0 %v520
        %611 = vmatprep.subr.mxu0 0.0
        %612 = vmatpush2.xpose.msra.mxu0 %v517
        %613 = vmatprep.subr.mxu0 0.0
        %614 = vmatpush2.xpose.msra.mxu0 %v514
        %615 = vmatprep.subr.mxu0 0.0
        %616 = vmatpush2.xpose.msra.mxu0 %v511
        %617 = vmatprep.subr.mxu0 0.0
        %618 = vmatpush2.xpose.msra.mxu0 %v508
        %619 = vmatprep.mubr.f32.mxu0 0.0
        %620 = vmatmul.mubr.f32.gmra.mxu0 %v457
        %v621 = vpop.f32.mrf.mxu0
        %v622 = vadd.f32 0.0, %v621
        %v623 = vpop.f32.mrf.mxu0
        %v624 = vadd.f32 0.0, %v623
        %625 = vdwg.mxu0
        %v626 = vmax.f32 %v622, 1e-24
        %v627 = vmax.f32 %v624, 1e-24
        %v628 = vrsqrt.pop %v626
        %v629 = vrsqrt.pop %v627
        %v630 = vlaneseq
        %v631 = vshrl.u32 %v630, 7
        %v632 = vsub.s32 0, %v631
        %v633 = vrot.slane %v628, %v632
        %v634 = vlaneseq
        %v635 = vshrl.u32 %v634, 7
        %v636 = vsub.s32 0, %v635
        %v637 = vrot.slane %v629, %v636
        %v638 = vmul.f32 %v420, %v633
        %v639 = vmul.f32 %v422, %v637
        %v640 = vmax.f32 %v638, -1.0
        %v641 = vmax.f32 %v639, -1.0
        %v642 = vmin.f32 %v640, 1.0
        %v643 = vmin.f32 %v641, 1.0
        %v644 = vmul.f32 %v642, %v642
        %v645 = vmul.f32 %v643, %v643
        %v646 = vsub.f32 1.0, %v644
        %v647 = vsub.f32 1.0, %v645
        %v648 = vmax.f32 %v646, 0.0
        %v649 = vmax.f32 %v647, 0.0
        %v650 = vrsqrt.pop %v648
        %v651 = vmul.f32 %v648, %v650
        %vm652 = vcmp.eq.f32.partialorder %v648, inf
        %v653 = vsel %vm652, %v648, %v651
        %vm654 = vcmp.eq.f32.partialorder %v648, 0.0
        %v655 = vand.u32 %v648, 2147483648
        %v656 = vsel %vm654, %v655, %v653
        %v657 = vrsqrt.pop %v649
        %v658 = vmul.f32 %v649, %v657
        %vm659 = vcmp.eq.f32.partialorder %v649, inf
        %v660 = vsel %vm659, %v649, %v658
        %vm661 = vcmp.eq.f32.partialorder %v649, 0.0
        %v662 = vand.u32 %v649, 2147483648
        %v663 = vsel %vm661, %v662, %v660
        %v664 = vmul.f32 %v642, 0.87758255
        %v665 = vmul.f32 %v643, 0.87758255
        %v666 = vmul.f32 %v656, 0.47942555
        %v667 = vmul.f32 %v663, 0.47942555
        %v668 = vsub.f32 %v664, %v666
        %v669 = vsub.f32 %v665, %v667
        %vm670 = vcmp.gt.f32.partialorder %v642, -0.87758255
        %vm671 = vcmp.gt.f32.partialorder %v643, -0.87758255
        %v672 = vsub.f32 %v642, 0.23971277
        %v673 = vsub.f32 %v643, 0.23971277
        %v674 = vsel %vm670, %v668, %v672
        %v675 = vsel %vm671, %v669, %v673
        %v676 = vld [vmem:[%s208] sm:$0xff]
        %v677 = vlaneseq
        %v678 = vand.u32 %v677, 127
        %v679 = vadd.s32 %v678, 128
        %s680 = smul.u32 %s21, 256
        %v681 = vstv %s680
        %v682 = vadd.s32 %v678, %v681
        %v683 = vadd.s32 %v679, %v681
        %684 = vset.pattern.permute.xlu0 0
        %685 = vperm.xlu0 %684, %v676
        %v686 = vpop.permute.xlu0 %685
        %vm687 = vcmp.eq.s32.totalorder %v682, %v686
        %vm688 = vcmp.eq.s32.totalorder %v683, %v686
        %v689 = vsel %vm687, %v674, %v642
        %v690 = vsel %vm688, %v675, %v643
        %v691 = vmul.f32 %v689, 64.0
        %v692 = vmul.f32 %v690, 64.0
        %693 = vst [vmem:[%s204] sm:$0xff] %v691
        %694 = vst [vmem:[%s204 + $0x8] sm:$0xff] %v692
        %s695 = sand.u32 %s117, 1
        %s696 = scalar_lea.sflag [#allocation3], %s695
        %s697 = sand.u32 %s117, 1
        %s698 = smul.addr %s697, 16
        %s699 = scalar_lea.vmem [#allocation2], %s698
        // Predicated region
        $region33: #{tpu_custom_call.1} parent=31 // pred_check
          %p700 = pneg %p127
        $region34: #{tpu_custom_call.1} parent=31 // pred_check_branch
          %702 = sbr.rel (%p700) target = $region36
        $region35: #{tpu_custom_call.1} parent=31 // pred_region
          %s703 = smul.u32 2, %s21
          %s705 = ssub.s32 256, 256
          %706 = vsyncadd %s696, %s705
          %s707 = smul.addr %s22, 4
          %s708 = sadd.s32 %s703, %s707
          %s709 = smul.addr %s708, 128
          %s710 = scalar_lea.hbm %s3, %s709
          %s712 = sshll.u32 %s699, 4
          %s713 = int_to_ptr.vmem [resolvable:$true] %s712
          %715 = dma.vmem_to_hbm [thread:$0]  %s713, 256, %s710, %s696
        $region36: #{tpu_custom_call.1} parent=31 // pred_fallthru
          _
      $region32: #{tpu_custom_call.1} parent=5 // pred_fallthru
        _
      %p716 = scmp.le.s32.totalorder 2, %s12
      // Predicated region
      $region37: #{tpu_custom_call.1} parent=5 // pred_check
        %p717 = pneg %p716
      $region38: #{tpu_custom_call.1} parent=5 // pred_check_branch
        %719 = sbr.rel (%p717) target = $region40
      $region39: #{tpu_custom_call.1} parent=5 // pred_region
        %s720 = ssub.s32 %s12, 2
        // Predicated region
        $region41: #{tpu_custom_call.1} parent=39 // pred_check
          %p721 = pneg %p133
        $region42: #{tpu_custom_call.1} parent=39 // pred_check_branch
          %723 = sbr.rel (%p721) target = $region44
        $region43: #{tpu_custom_call.1} parent=39 // pred_region
          %s724 = sand.u32 %s118, 1
          %s725 = scalar_lea.sflag [#allocation3], %s724
          %s726 = sand.u32 %s118, 1
          %s727 = smul.addr %s726, 16
          %s728 = scalar_lea.vmem [#allocation2], %s727
          %729 = dma.done %s725, 256
        $region44: #{tpu_custom_call.1} parent=39 // pred_fallthru
          _
      $region40: #{tpu_custom_call.1} parent=5 // pred_fallthru
        _
    $region6: #{tpu_custom_call.1} parent=1 // loop_footer
      %s16 = sadd.s32 1, %s12
    $region7: #{tpu_custom_call.1} parent=1 // loop_footer_branch
      %11 = sbr.rel target = $region3
    $region8: #{tpu_custom_call.1} parent=1 // loop_exit
      _
    %730 = vsyncpa [#allocation3], 1
    %s731 = scalar_lea.sflag [#allocation3], 1
    %732 = vsyncpa %s731, 1

</llo_original>
